<compile_context>
chip_gen: v7x
topology: tpu7x:2x2x1
jax: 0.10.0
libtpu: 0.0.40
codegen_flags: <defaults>
</compile_context>

<pallas_src>
import functools

import jax
import jax.numpy as jnp
from jax.experimental import pallas as pl
from jax.experimental.pallas import tpu as pltpu


# Row layout of the packed (8, d) parameter-vector slab.
_B0, _G0, _BE0, _B1, _G1, _BE1, _B2 = 0, 1, 2, 3, 4, 5, 6
_EPS = 1e-5


# --------------------------------------------------------------------------------
# Path 1: grid-less fused kernel (small batch; everything VMEM-resident).
# --------------------------------------------------------------------------------
def _xi_small_kernel(x_ref, w0_ref, w1_ref, w2_ref, vec_ref, o_ref, *, apply_bn):
    eps = jnp.float32(_EPS)
    n = x_ref.shape[0]
    inv_n = jnp.float32(1.0 / n)

    def batchnorm(h, g_row, be_row):
        # training-mode BatchNorm1d, one-pass biased variance, folded to one FMA.
        mean = jnp.sum(h, axis=0, keepdims=True) * inv_n
        var = jnp.sum(h * h, axis=0, keepdims=True) * inv_n - mean * mean
        scale = g_row * jax.lax.rsqrt(var + eps)          # (1, d) — rsqrt on EUP
        shift = be_row - mean * scale                     # (1, d)
        return h * scale + shift

    x = x_ref[...].astype(jnp.bfloat16)                   # MXU feed in bf16
    b0 = vec_ref[_B0:_B0 + 1, :]
    b1 = vec_ref[_B1:_B1 + 1, :]
    b2 = vec_ref[_B2:_B2 + 1, :]

    h = jnp.maximum(
        jnp.dot(x, w0_ref[...], preferred_element_type=jnp.float32) + b0, 0.0)
    if apply_bn:  # static: mirrors `if o.size(0) > 1` (batch known at trace time)
        h = batchnorm(h, vec_ref[_G0:_G0 + 1, :], vec_ref[_BE0:_BE0 + 1, :])

    h = jnp.maximum(
        jnp.dot(h.astype(jnp.bfloat16), w1_ref[...],
                preferred_element_type=jnp.float32) + b1, 0.0)
    if apply_bn:
        h = batchnorm(h, vec_ref[_G1:_G1 + 1, :], vec_ref[_BE1:_BE1 + 1, :])

    h = jnp.dot(h.astype(jnp.bfloat16), w2_ref[...],
                preferred_element_type=jnp.float32) + b2
    o_ref[...] = jnp.tanh(h).astype(o_ref.dtype)


# --------------------------------------------------------------------------------
# Path 2: batch-tiled, 3-pass grid kernel (large batch; pipelined; BN folded).
# grid = (3 passes, num_batch_tiles); both axes "arbitrary" (sequential deps).
# --------------------------------------------------------------------------------
def _xi_grid_kernel(x_ref, w0_ref, w1_ref, w2_ref, vec_ref, o_ref,
                    stats_ref, w1f_ref, w2f_ref, bias_ref,
                    *, batch, tile_rows):
    p = pl.program_id(0)            # pass: 0 = BN0 stats, 1 = BN1 stats, 2 = output
    t = pl.program_id(1)            # batch tile
    num_t = pl.num_programs(1)
    eps = jnp.float32(_EPS)
    inv_n = jnp.float32(1.0 / batch)
    need_mask = (batch % tile_rows) != 0                   # static

    @pl.when(jnp.logical_and(p == 0, t == 0))
    def _init():
        stats_ref[...] = jnp.zeros_like(stats_ref)

    def masked(h):
        if not need_mask:
            return h
        rows = jax.lax.broadcasted_iota(jnp.int32, h.shape, 0) + t * tile_rows
        return jnp.where(rows < batch, h, 0.0)

    def fold(sum_row, sq_row, g_row, be_row, w_ref, b_row, wf_ref, bias_slot):
        # Fold BN scale into the next layer's bf16 weights and BN shift into its
        # f32 bias: BN(h) @ W + b == h @ (scale_col * W) + (sum(W * shift_col) + b)
        mean = sum_row * inv_n
        var = sq_row * inv_n - mean * mean
        scale = g_row * jax.lax.rsqrt(var + eps)           # (1, d_in)
        shift = be_row - mean * scale                      # (1, d_in)
        w32 = w_ref[...].astype(jnp.float32)               # (d_in, d_out)
        d_in, d_out = w32.shape
        scale_full = jnp.broadcast_to(scale, (d_out, d_in)).T   # [i, j] = scale[0, i]
        shift_full = jnp.broadcast_to(shift, (d_out, d_in)).T
        wf_ref[...] = (w32 * scale_full).astype(jnp.bfloat16)
        bias_ref[bias_slot:bias_slot + 1, :] = (
            jnp.sum(w32 * shift_full, axis=0, keepdims=True) + b_row)

    # Layer 0 is (re)computed every pass (o_dim contraction is cheap vs HBM roundtrip).
    x = x_ref[...].astype(jnp.bfloat16)
    b0 = vec_ref[_B0:_B0 + 1, :]
    h0 = jnp.maximum(
        jnp.dot(x, w0_ref[...], preferred_element_type=jnp.float32) + b0, 0.0)

    @pl.when(p == 0)
    def _pass0():
        hm = masked(h0)
        stats_ref[0:1, :] += jnp.sum(hm, axis=0, keepdims=True)
        stats_ref[1:2, :] += jnp.sum(hm * hm, axis=0, keepdims=True)

        @pl.when(t == num_t - 1)
        def _finalize0():
            fold(stats_ref[0:1, :], stats_ref[1:2, :],
                 vec_ref[_G0:_G0 + 1, :], vec_ref[_BE0:_BE0 + 1, :],
                 w1_ref, vec_ref[_B1:_B1 + 1, :], w1f_ref, 0)

    @pl.when(p >= 1)
    def _later_passes():
        h1 = jnp.maximum(
            jnp.dot(h0.astype(jnp.bfloat16), w1f_ref[...],
                    preferred_element_type=jnp.float32) + bias_ref[0:1, :], 0.0)

        @pl.when(p == 1)
        def _pass1():
            hm = masked(h1)
            stats_ref[2:3, :] += jnp.sum(hm, axis=0, keepdims=True)
            stats_ref[3:4, :] += jnp.sum(hm * hm, axis=0, keepdims=True)

            @pl.when(t == num_t - 1)
            def _finalize1():
                fold(stats_ref[2:3, :], stats_ref[3:4, :],
                     vec_ref[_G1:_G1 + 1, :], vec_ref[_BE1:_BE1 + 1, :],
                     w2_ref, vec_ref[_B2:_B2 + 1, :], w2f_ref, 1)

        @pl.when(p == 2)
        def _pass2():
            z = jnp.dot(h1.astype(jnp.bfloat16), w2f_ref[...],
                        preferred_element_type=jnp.float32) + bias_ref[1:2, :]
            o_ref[...] = jnp.tanh(z).astype(o_ref.dtype)


# --------------------------------------------------------------------------------
# Wrapper
# --------------------------------------------------------------------------------
def xi_forward(o, params, *, out_dtype=jnp.float32, batch_tile=None, force_grid=False):
    """o: (B, o_dim) f32 (or bf16). params from init_xi_params."""
    B, o_dim = o.shape
    d0 = params["w0"].shape[1]
    d1 = params["w1"].shape[1]
    d_out = params["w2"].shape[1]
    apply_bn = B > 1
    out_itemsize = jnp.dtype(out_dtype).itemsize

    weight_bytes = (o_dim * d0 + d0 * d1 + d1 * d_out) * 2      # bf16
    d_max = max(d0, d1, d_out)
    # rough VMEM footprint of the grid-less path (input + bf16 copy + weights + slab
    # + ~6 live (B, d) f32 intermediates/output)
    small_live = B * o_dim * 6 + weight_bytes + 8 * d0 * 4 + 6 * B * d_max * 4
    use_grid = apply_bn and (force_grid or small_live > 24 * 1024 * 1024)

    if not use_grid:
        # ---------------- grid-less fused path ----------------
        kernel = functools.partial(_xi_small_kernel, apply_bn=apply_bn)
        flops = 2 * B * (o_dim * d0 + d0 * d1 + d1 * d_out)
        transcendentals = B * d_out + (2 * (d0 + d1) if apply_bn else 0)
        cost = pl.CostEstimate(
            flops=flops, transcendentals=transcendentals,
            bytes_accessed=(o.size * o.dtype.itemsize + B * d_out * out_itemsize
                            + weight_bytes + params["vec"].size * 4))
        vmem_limit = int(min(112 * 1024 * 1024, 2 * small_live + 2 * 1024 * 1024))
        vmem_spec = pl.BlockSpec(memory_space=pltpu.MemorySpace.VMEM)
        return pl.pallas_call(
            kernel,
            out_shape=jax.ShapeDtypeStruct((B, d_out), out_dtype),
            in_specs=[vmem_spec] * 5,
            out_specs=vmem_spec,
            compiler_params=pltpu.CompilerParams(vmem_limit_bytes=vmem_limit),
            cost_estimate=cost,
        )(o, params["w0"], params["w1"], params["w2"], params["vec"])

    # ---------------- batch-tiled 3-pass path ----------------
    assert d0 == d1 == d_out, "grid path assumes a uniform hidden width"
    d = d0
    tb = 1024 if batch_tile is None else batch_tile
    tb = max(8, min(int(tb), 2048))
    tb = (tb // 8) * 8
    num_tiles = -(-B // tb)
    b_pad = num_tiles * tb
    x_in = o if b_pad == B else jnp.pad(o, ((0, b_pad - B), (0, 0)))

    kernel = functools.partial(_xi_grid_kernel, batch=B, tile_rows=tb)

    grid_spec = pltpu.PrefetchScalarGridSpec(
        num_scalar_prefetch=0,
        grid=(3, num_tiles),
        in_specs=[
            pl.BlockSpec((tb, o_dim), lambda p, t: (t, 0)),      # x tile per pass
            pl.BlockSpec((o_dim, d), lambda p, t: (0, 0)),       # weights stay resident
            pl.BlockSpec((d, d), lambda p, t: (0, 0)),
            pl.BlockSpec((d, d), lambda p, t: (0, 0)),
            pl.BlockSpec((8, d), lambda p, t: (0, 0)),
        ],
        # output blocks only advance on the final (emit) pass -> exactly one
        # writeback per tile, no garbage writebacks during the stats passes.
        out_specs=pl.BlockSpec((tb, d), lambda p, t: (t * (p // 2), 0)),
        scratch_shapes=[
            pltpu.VMEM((4, d), jnp.float32),      # [sum0, sumsq0, sum1, sumsq1]
            pltpu.VMEM((d, d), jnp.bfloat16),     # W1 with BN0 folded in
            pltpu.VMEM((d, d), jnp.bfloat16),     # W2 with BN1 folded in
            pltpu.VMEM((2, d), jnp.float32),      # [b1_eff, b2_eff]
        ],
    )

    vmem_limit = int(min(
        112 * 1024 * 1024,
        2 * tb * o_dim * 4            # double-buffered input tile
        + 2 * tb * d * out_itemsize   # double-buffered output tile
        + 2 * weight_bytes            # resident weight tiles (+ headroom)
        + 2 * d * d * 2 + 6 * d * 4   # folded weights / stats / bias scratch
        + 8 * tb * d * 4              # live f32 intermediates
        + 4 * 1024 * 1024))           # slack
    flops = 2 * b_pad * (3 * o_dim * d + 3 * d * d)             # includes recompute
    cost = pl.CostEstimate(
        flops=flops,
        transcendentals=b_pad * d + 2 * d,
        bytes_accessed=(3 * b_pad * o_dim * 4 + b_pad * d * out_itemsize
                        + weight_bytes + 8 * d * 4))

    out = pl.pallas_call(
        kernel,
        out_shape=jax.ShapeDtypeStruct((b_pad, d), out_dtype),
        grid_spec=grid_spec,
        compiler_params=pltpu.CompilerParams(
            dimension_semantics=("arbitrary", "arbitrary"),
            vmem_limit_bytes=vmem_limit),
        cost_estimate=cost,
    )(x_in, params["w0"], params["w1"], params["w2"], params["vec"])
    return out if b_pad == B else out[:B]


# --------------------------------------------------------------------------------
# Parameter init (synthetic, matches Xi.__init__ shapes)
# --------------------------------------------------------------------------------
def init_xi_params(key, o_dim, network_dims=(256, 256, 256)):
    """Weights stored transposed as (in, out) in bf16; the three biases and two
    BatchNorm affine pairs are packed into one (8, d) f32 slab `vec`:
      rows: [b0, g0, be0, b1, g1, be1, b2, <pad>]."""
    dims = [o_dim] + list(network_dims)
    assert len(set(network_dims)) == 1, "slab packing assumes a uniform hidden width"
    d = network_dims[-1]

    params = {}
    vec = jnp.zeros((8, d), jnp.float32)
    keys = jax.random.split(key, 2 * (len(dims) - 1))
    bias_rows = (_B0, _B1, _B2)
    gamma_rows = (_G0, _G1)
    beta_rows = (_BE0, _BE1)
    for i in range(len(dims) - 1):
        fan_in = dims[i]
        bound = 1.0 / jnp.sqrt(fan_in)
        w = jax.random.uniform(keys[2 * i], (fan_in, dims[i + 1]),
                               jnp.float32, -bound, bound)
        params[f"w{i}"] = w.astype(jnp.bfloat16)
        b = jax.random.uniform(keys[2 * i + 1], (dims[i + 1],),
                               jnp.float32, -bound, bound)
        vec = vec.at[bias_rows[i]].set(b)
        if i < len(dims) - 2:  # BatchNorm1d affine params (default: gamma=1, beta=0)
            vec = vec.at[gamma_rows[i]].set(jnp.ones((dims[i + 1],), jnp.float32))
            vec = vec.at[beta_rows[i]].set(jnp.zeros((dims[i + 1],), jnp.float32))
    params["vec"] = vec
    return params


# --------------------------------------------------------------------------------
# Self-test
# --------------------------------------------------------------------------------
if __name__ == "__main__":
    O_DIM = 32
    NET = (256, 256, 256)
    key = jax.random.PRNGKey(0)
    k_par, k_x1, k_x2 = jax.random.split(key, 3)
    params = init_xi_params(k_par, O_DIM, network_dims=NET)

    # Pure-JAX reference mirroring module semantics (bf16 MXU feed, f32 accumulate,
    # training-mode BN with two-pass biased variance).
    def ref(o, p):
        eps = jnp.float32(_EPS)
        vec = p["vec"]

        def lin(h, w, brow):
            return jnp.dot(h.astype(jnp.bfloat16), w,
                           preferred_element_type=jnp.float32) + vec[brow:brow + 1, :]

        def bn(h, grow, berow):
            m = h.mean(0, keepdims=True)
            v = ((h - m) ** 2).mean(0, keepdims=True)
            s = vec[grow:grow + 1, :] * jax.lax.rsqrt(v + eps)
            return h * s + (vec[berow:berow + 1, :] - m * s)

        apply_bn = o.shape[0] > 1
        h = jnp.maximum(lin(o, p["w0"], _B0), 0.0)
        if apply_bn:
            h = bn(h, _G0, _BE0)
        h = jnp.maximum(lin(h, p["w1"], _B1), 0.0)
        if apply_bn:
            h = bn(h, _G1, _BE1)
        return jnp.tanh(lin(h, p["w2"], _B2))

    # Reference mirroring the grid path's exact math (one-pass variance, BN folded
    # into the next layer's bf16 weights + f32 bias).
    def ref_folded(o, p):
        eps = jnp.float32(_EPS)
        vec = p["vec"]
        n = o.shape[0]

        def stats_fold(h, grow, berow, w_next):
            mean = jnp.sum(h, 0, keepdims=True) / n
            var = jnp.sum(h * h, 0, keepdims=True) / n - mean * mean
            scale = vec[grow:grow + 1, :] * jax.lax.rsqrt(var + eps)
            shift = vec[berow:berow + 1, :] - mean * scale
            w32 = w_next.astype(jnp.float32)
            wf = (w32 * scale[0][:, None]).astype(jnp.bfloat16)
            db = jnp.sum(w32 * shift[0][:, None], axis=0, keepdims=True)
            return wf, db

        h0 = jnp.maximum(jnp.dot(o.astype(jnp.bfloat16), p["w0"],
                                 preferred_element_type=jnp.float32)
                         + vec[_B0:_B0 + 1, :], 0.0)
        w1f, db1 = stats_fold(h0, _G0, _BE0, p["w1"])
        h1 = jnp.maximum(jnp.dot(h0.astype(jnp.bfloat16), w1f,
                                 preferred_element_type=jnp.float32)
                         + vec[_B1:_B1 + 1, :] + db1, 0.0)
        w2f, db2 = stats_fold(h1, _G1, _BE1, p["w2"])
        z = (jnp.dot(h1.astype(jnp.bfloat16), w2f, preferred_element_type=jnp.float32)
             + vec[_B2:_B2 + 1, :] + db2)
        return jnp.tanh(z)

    # 1) grid-less fused path (small batch)
    B1 = 8
    x1 = jax.random.normal(k_x1, (B1, O_DIM), jnp.float32)
    out1 = xi_forward(x1, params)
    jax.block_until_ready(out1)
    exp1 = ref(x1, params)
    assert out1.shape == (B1, NET[-1]), out1.shape
    err1 = float(jnp.max(jnp.abs(out1 - exp1)))
    assert jnp.allclose(out1, exp1, atol=2e-3, rtol=2e-3), err1

    # 2) batch-tiled 3-pass path, exercised at a small shape with a ragged last tile
    B2 = 12
    x2 = jax.random.normal(k_x2, (B2, O_DIM), jnp.float32)
    out2 = xi_forward(x2, params, force_grid=True, batch_tile=8)
    jax.block_until_ready(out2)
    assert out2.shape == (B2, NET[-1]), out2.shape
    exp2_folded = ref_folded(x2, params)
    err2 = float(jnp.max(jnp.abs(out2 - exp2_folded)))
    assert jnp.allclose(out2, exp2_folded, atol=2e-3, rtol=2e-3), err2
    # semantic parity with the straightforward (unfolded) formulation
    exp2_plain = ref(x2, params)
    err2p = float(jnp.max(jnp.abs(out2 - exp2_plain)))
    assert jnp.allclose(out2, exp2_plain, atol=3e-2, rtol=3e-2), err2p

    print("KERNEL_OK")
</pallas_src>

<mosaic_0001>
module attributes {stable_mosaic.version = 11 : i64} {
  func.func @_xi_small_kernel(%arg0: memref<8x32xf32, #tpu.memory_space<vmem>>, %arg1: memref<32x256xbf16, #tpu.memory_space<vmem>>, %arg2: memref<256x256xbf16, #tpu.memory_space<vmem>>, %arg3: memref<256x256xbf16, #tpu.memory_space<vmem>>, %arg4: memref<8x256xf32, #tpu.memory_space<vmem>>, %arg5: memref<8x256xf32, #tpu.memory_space<vmem>>) attributes {dimension_semantics = [], scalar_prefetch = 0 : i64, scratch_operands = 0 : i64, tpu.core_type = #tpu.core_type<tc>} {
    %c0 = arith.constant 0 : index
    %c0_0 = arith.constant 0 : index
    %0 = vector.load %arg0[%c0, %c0_0] : memref<8x32xf32, #tpu.memory_space<vmem>>, vector<8x32xf32>
    %1 = arith.truncf %0 : vector<8x32xf32> to vector<8x32xbf16>
    %c0_1 = arith.constant 0 : index
    %c0_2 = arith.constant 0 : index
    %2 = vector.load %arg4[%c0_1, %c0_2] : memref<8x256xf32, #tpu.memory_space<vmem>>, vector<1x256xf32>
    %c3 = arith.constant 3 : index
    %c0_3 = arith.constant 0 : index
    %3 = vector.load %arg4[%c3, %c0_3] : memref<8x256xf32, #tpu.memory_space<vmem>>, vector<1x256xf32>
    %c6 = arith.constant 6 : index
    %c0_4 = arith.constant 0 : index
    %4 = vector.load %arg4[%c6, %c0_4] : memref<8x256xf32, #tpu.memory_space<vmem>>, vector<1x256xf32>
    %c0_5 = arith.constant 0 : index
    %c0_6 = arith.constant 0 : index
    %5 = vector.load %arg1[%c0_5, %c0_6] : memref<32x256xbf16, #tpu.memory_space<vmem>>, vector<32x256xbf16>
    %cst = arith.constant dense<0.000000e+00> : vector<8x256xf32>
    %6 = tpu.matmul %1, %5, %cst {dimension_numbers = #tpu.dot_dimension_numbers<[1], [0], [0], [1], [0, 0, 1, 1], [], []>} : vector<8x32xbf16>, vector<32x256xbf16>, vector<8x256xf32> -> vector<8x256xf32>
    %7 = vector.broadcast %2 : vector<1x256xf32> to vector<8x256xf32>
    %8 = arith.addf %6, %7 : vector<8x256xf32>
    %cst_7 = arith.constant 0.000000e+00 : f32
    %9 = vector.broadcast %cst_7 : f32 to vector<8x256xf32>
    %10 = arith.maximumf %8, %9 : vector<8x256xf32>
    %c1 = arith.constant 1 : index
    %c0_8 = arith.constant 0 : index
    %11 = vector.load %arg4[%c1, %c0_8] : memref<8x256xf32, #tpu.memory_space<vmem>>, vector<1x256xf32>
    %c2 = arith.constant 2 : index
    %c0_9 = arith.constant 0 : index
    %12 = vector.load %arg4[%c2, %c0_9] : memref<8x256xf32, #tpu.memory_space<vmem>>, vector<1x256xf32>
    %cst_10 = arith.constant dense<0.000000e+00> : vector<256xf32>
    %13 = vector.multi_reduction <add>, %10, %cst_10 [0] : vector<8x256xf32> to vector<256xf32>
    %14 = vector.shape_cast %13 : vector<256xf32> to vector<1x256xf32>
    %cst_11 = arith.constant 1.250000e-01 : f32
    %15 = vector.broadcast %cst_11 : f32 to vector<1x256xf32>
    %16 = arith.mulf %14, %15 : vector<1x256xf32>
    %17 = arith.mulf %10, %10 : vector<8x256xf32>
    %cst_12 = arith.constant dense<0.000000e+00> : vector<256xf32>
    %18 = vector.multi_reduction <add>, %17, %cst_12 [0] : vector<8x256xf32> to vector<256xf32>
    %19 = vector.shape_cast %18 : vector<256xf32> to vector<1x256xf32>
    %cst_13 = arith.constant 1.250000e-01 : f32
    %20 = vector.broadcast %cst_13 : f32 to vector<1x256xf32>
    %21 = arith.mulf %19, %20 : vector<1x256xf32>
    %22 = arith.mulf %16, %16 : vector<1x256xf32>
    %23 = arith.subf %21, %22 : vector<1x256xf32>
    %cst_14 = arith.constant 9.99999974E-6 : f32
    %24 = vector.broadcast %cst_14 : f32 to vector<1x256xf32>
    %25 = arith.addf %23, %24 : vector<1x256xf32>
    %26 = math.rsqrt %25 : vector<1x256xf32>
    %27 = arith.mulf %11, %26 : vector<1x256xf32>
    %28 = arith.mulf %16, %27 : vector<1x256xf32>
    %29 = arith.subf %12, %28 : vector<1x256xf32>
    %30 = vector.broadcast %27 : vector<1x256xf32> to vector<8x256xf32>
    %31 = arith.mulf %10, %30 : vector<8x256xf32>
    %32 = vector.broadcast %29 : vector<1x256xf32> to vector<8x256xf32>
    %33 = arith.addf %31, %32 : vector<8x256xf32>
    %34 = arith.truncf %33 : vector<8x256xf32> to vector<8x256xbf16>
    %c0_15 = arith.constant 0 : index
    %c0_16 = arith.constant 0 : index
    %35 = vector.load %arg2[%c0_15, %c0_16] : memref<256x256xbf16, #tpu.memory_space<vmem>>, vector<256x256xbf16>
    %cst_17 = arith.constant dense<0.000000e+00> : vector<8x256xf32>
    %36 = tpu.matmul %34, %35, %cst_17 {dimension_numbers = #tpu.dot_dimension_numbers<[1], [0], [0], [1], [0, 0, 1, 1], [], []>} : vector<8x256xbf16>, vector<256x256xbf16>, vector<8x256xf32> -> vector<8x256xf32>
    %37 = vector.broadcast %3 : vector<1x256xf32> to vector<8x256xf32>
    %38 = arith.addf %36, %37 : vector<8x256xf32>
    %cst_18 = arith.constant 0.000000e+00 : f32
    %39 = vector.broadcast %cst_18 : f32 to vector<8x256xf32>
    %40 = arith.maximumf %38, %39 : vector<8x256xf32>
    %c4 = arith.constant 4 : index
    %c0_19 = arith.constant 0 : index
    %41 = vector.load %arg4[%c4, %c0_19] : memref<8x256xf32, #tpu.memory_space<vmem>>, vector<1x256xf32>
    %c5 = arith.constant 5 : index
    %c0_20 = arith.constant 0 : index
    %42 = vector.load %arg4[%c5, %c0_20] : memref<8x256xf32, #tpu.memory_space<vmem>>, vector<1x256xf32>
    %cst_21 = arith.constant dense<0.000000e+00> : vector<256xf32>
    %43 = vector.multi_reduction <add>, %40, %cst_21 [0] : vector<8x256xf32> to vector<256xf32>
    %44 = vector.shape_cast %43 : vector<256xf32> to vector<1x256xf32>
    %cst_22 = arith.constant 1.250000e-01 : f32
    %45 = vector.broadcast %cst_22 : f32 to vector<1x256xf32>
    %46 = arith.mulf %44, %45 : vector<1x256xf32>
    %47 = arith.mulf %40, %40 : vector<8x256xf32>
    %cst_23 = arith.constant dense<0.000000e+00> : vector<256xf32>
    %48 = vector.multi_reduction <add>, %47, %cst_23 [0] : vector<8x256xf32> to vector<256xf32>
    %49 = vector.shape_cast %48 : vector<256xf32> to vector<1x256xf32>
    %cst_24 = arith.constant 1.250000e-01 : f32
    %50 = vector.broadcast %cst_24 : f32 to vector<1x256xf32>
    %51 = arith.mulf %49, %50 : vector<1x256xf32>
    %52 = arith.mulf %46, %46 : vector<1x256xf32>
    %53 = arith.subf %51, %52 : vector<1x256xf32>
    %cst_25 = arith.constant 9.99999974E-6 : f32
    %54 = vector.broadcast %cst_25 : f32 to vector<1x256xf32>
    %55 = arith.addf %53, %54 : vector<1x256xf32>
    %56 = math.rsqrt %55 : vector<1x256xf32>
    %57 = arith.mulf %41, %56 : vector<1x256xf32>
    %58 = arith.mulf %46, %57 : vector<1x256xf32>
    %59 = arith.subf %42, %58 : vector<1x256xf32>
    %60 = vector.broadcast %57 : vector<1x256xf32> to vector<8x256xf32>
    %61 = arith.mulf %40, %60 : vector<8x256xf32>
    %62 = vector.broadcast %59 : vector<1x256xf32> to vector<8x256xf32>
    %63 = arith.addf %61, %62 : vector<8x256xf32>
    %64 = arith.truncf %63 : vector<8x256xf32> to vector<8x256xbf16>
    %c0_26 = arith.constant 0 : index
    %c0_27 = arith.constant 0 : index
    %65 = vector.load %arg3[%c0_26, %c0_27] : memref<256x256xbf16, #tpu.memory_space<vmem>>, vector<256x256xbf16>
    %cst_28 = arith.constant dense<0.000000e+00> : vector<8x256xf32>
    %66 = tpu.matmul %64, %65, %cst_28 {dimension_numbers = #tpu.dot_dimension_numbers<[1], [0], [0], [1], [0, 0, 1, 1], [], []>} : vector<8x256xbf16>, vector<256x256xbf16>, vector<8x256xf32> -> vector<8x256xf32>
    %67 = vector.broadcast %4 : vector<1x256xf32> to vector<8x256xf32>
    %68 = arith.addf %66, %67 : vector<8x256xf32>
    %69 = math.tanh %68 : vector<8x256xf32>
    %c0_29 = arith.constant 0 : index
    %c0_30 = arith.constant 0 : index
    %70 = vector.load %arg5[%c0_29, %c0_30] : memref<8x256xf32, #tpu.memory_space<vmem>>, vector<8x256xf32>
    tpu.vector_store %arg5[%c0_29, %c0_30], %69 {strides = array<i32>} : memref<8x256xf32, #tpu.memory_space<vmem>>, vector<8x256xf32>,
    return
  }
}

</mosaic_0001>

<llo_original>
// kernel: tpu_custom_call.1
$region0: #{tpu_custom_call.1}
  #allocation0 [shape = 'u32[]', space=smem, size = 0x4, offset = 0x4, fixed_abs, tag = 'smem constant byte address 0x4 - core index']
  #allocation1 [shape = 'u32[144,128]{1,0:T(1,128)}', space=vmem, size = 0x12000, scoped, tag = 'internal scratch']
  %s0 = inlined_call_operand.hbm [shape: f32[8,32], index: 0, kind: input, shape index: {}]
  %s1 = inlined_call_operand.hbm [shape: bf16[32,256], index: 1, kind: input, shape index: {}]
  %s2 = inlined_call_operand.hbm [shape: bf16[256,256], index: 2, kind: input, shape index: {}]
  %s3 = inlined_call_operand.hbm [shape: bf16[256,256], index: 3, kind: input, shape index: {}]
  %s4 = inlined_call_operand.hbm [shape: f32[8,256], index: 4, kind: input, shape index: {}]
  %s5 = inlined_call_operand.hbm [shape: f32[8,256], index: 5, kind: output, shape index: {}]
  %s6 = sld [smem:[#allocation0]]
  $region50: #{tpu_custom_call.1} parent=0
    _
  %s8 = ssub.s32 1, %s6
  %s9 = scalar_select 0, %s8, %s6
  $region1: #{tpu_custom_call.1} parent=0
    #allocation2 [shape = 'u8[4096]{0}', space=vmem, size = 0x1000, scoped, tag = 'input window, operand 0, single buffered']
    #allocation3 [shape = 's32[1]{0}', space=sflag, size = 0x4, scoped, tag = 'scoped memory for tpu_custom_call.1']
    #allocation4 [shape = 's32[1]{0}', space=sflag, size = 0x4, scoped, tag = 'scoped memory for tpu_custom_call.1']
    #allocation5 [shape = 'u8[16384]{0}', space=vmem, size = 0x4000, scoped, tag = 'input window, operand 1, single buffered']
    #allocation6 [shape = 's32[1]{0}', space=sflag, size = 0x4, scoped, tag = 'scoped memory for tpu_custom_call.1']
    #allocation7 [shape = 'u8[131072]{0}', space=vmem, size = 0x20000, scoped, tag = 'input window, operand 2, single buffered']
    #allocation8 [shape = 'u8[131072]{0}', space=vmem, size = 0x20000, scoped, tag = 'input window, operand 3, single buffered']
    #allocation9 [shape = 's32[1]{0}', space=sflag, size = 0x4, scoped, tag = 'scoped memory for tpu_custom_call.1']
    #allocation10 [shape = 'u8[8192]{0}', space=vmem, size = 0x2000, scoped, tag = 'input window, operand 4, single buffered']
    #allocation11 [shape = 'u8[8192]{0}', space=vmem, size = 0x2000, scoped, tag = 'output window, operand 0, single buffered']
    %10 = vsyncpa [#allocation3], 0
    %11 = vsyncpa [#allocation6], 0
    %12 = vsyncpa [#allocation9], 0
    %13 = vsyncpa [#allocation4], 0
    // Predicated region
    $region2: #{tpu_custom_call.1} parent=1 // pred_check
      _
    $region3: #{tpu_custom_call.1} parent=1 // pred_check_branch
      %15 = sbr.rel (0) target = $region5
    $region4: #{tpu_custom_call.1} parent=1 // pred_region
      %s17 = ssub.s32 128, 128
      %18 = vsyncadd [#allocation3], %s17
      %s20 = sshll.u32 [#allocation2], 4
      %s21 = int_to_ptr.vmem [resolvable:$true] %s20
      %23 = dma.hbm_to_vmem [thread:$0]  %s0, 128, %s21, [#allocation3]
    $region5: #{tpu_custom_call.1} parent=1 // pred_fallthru
      _
    // Predicated region
    $region6: #{tpu_custom_call.1} parent=1 // pred_check
      _
    $region7: #{tpu_custom_call.1} parent=1 // pred_check_branch
      %25 = sbr.rel (0) target = $region9
    $region8: #{tpu_custom_call.1} parent=1 // pred_region
      %s27 = ssub.s32 512, 512
      %28 = vsyncadd [#allocation6], %s27
      %s29 = sshll.u32 [#allocation5], 4
      %s30 = int_to_ptr.vmem [resolvable:$true] %s29
      %35 = dma.hbm_to_vmem [thread:$0]  %s1, 512, %s30, [#allocation6], 128, 128, 8
    $region9: #{tpu_custom_call.1} parent=1 // pred_fallthru
      _
    // Predicated region
    $region10: #{tpu_custom_call.1} parent=1 // pred_check
      _
    $region11: #{tpu_custom_call.1} parent=1 // pred_check_branch
      %37 = sbr.rel (0) target = $region13
    $region12: #{tpu_custom_call.1} parent=1 // pred_region
      %s39 = ssub.s32 4096, 4096
      %40 = vsyncadd [#allocation6], %s39
      %s41 = sshll.u32 [#allocation7], 4
      %s42 = int_to_ptr.vmem [resolvable:$true] %s41
      %47 = dma.hbm_to_vmem [thread:$0]  %s2, 4096, %s42, [#allocation6], 128, 128, 8
    $region13: #{tpu_custom_call.1} parent=1 // pred_fallthru
      _
    // Predicated region
    $region14: #{tpu_custom_call.1} parent=1 // pred_check
      _
    $region15: #{tpu_custom_call.1} parent=1 // pred_check_branch
      %49 = sbr.rel (0) target = $region17
    $region16: #{tpu_custom_call.1} parent=1 // pred_region
      %s51 = ssub.s32 4096, 4096
      %52 = vsyncadd [#allocation9], %s51
      %s53 = sshll.u32 [#allocation8], 4
      %s54 = int_to_ptr.vmem [resolvable:$true] %s53
      %59 = dma.hbm_to_vmem [thread:$0]  %s3, 4096, %s54, [#allocation9], 128, 128, 8
    $region17: #{tpu_custom_call.1} parent=1 // pred_fallthru
      _
    // Predicated region
    $region18: #{tpu_custom_call.1} parent=1 // pred_check
      _
    $region19: #{tpu_custom_call.1} parent=1 // pred_check_branch
      %61 = sbr.rel (0) target = $region21
    $region20: #{tpu_custom_call.1} parent=1 // pred_region
      %s63 = ssub.s32 256, 256
      %64 = vsyncadd [#allocation9], %s63
      %s66 = sshll.u32 [#allocation10], 4
      %s67 = int_to_ptr.vmem [resolvable:$true] %s66
      %69 = dma.hbm_to_vmem [thread:$0]  %s4, 256, %s67, [#allocation9]
    $region21: #{tpu_custom_call.1} parent=1 // pred_fallthru
      _
    // Predicated region
    $region22: #{tpu_custom_call.1} parent=1 // pred_check
      _
    $region23: #{tpu_custom_call.1} parent=1 // pred_check_branch
      %71 = sbr.rel (0) target = $region25
    $region24: #{tpu_custom_call.1} parent=1 // pred_region
      %72 = dma.done [#allocation3], 128
    $region25: #{tpu_custom_call.1} parent=1 // pred_fallthru
      _
    // Predicated region
    $region26: #{tpu_custom_call.1} parent=1 // pred_check
      _
    $region27: #{tpu_custom_call.1} parent=1 // pred_check_branch
      %74 = sbr.rel (0) target = $region29
    $region28: #{tpu_custom_call.1} parent=1 // pred_region
      %75 = dma.done [#allocation6], 512
    $region29: #{tpu_custom_call.1} parent=1 // pred_fallthru
      _
    // Predicated region
    $region30: #{tpu_custom_call.1} parent=1 // pred_check
      _
    $region31: #{tpu_custom_call.1} parent=1 // pred_check_branch
      %77 = sbr.rel (0) target = $region33
    $region32: #{tpu_custom_call.1} parent=1 // pred_region
      %78 = dma.done [#allocation6], 4096
    $region33: #{tpu_custom_call.1} parent=1 // pred_fallthru
      _
    // Predicated region
    $region34: #{tpu_custom_call.1} parent=1 // pred_check
      _
    $region35: #{tpu_custom_call.1} parent=1 // pred_check_branch
      %80 = sbr.rel (0) target = $region37
    $region36: #{tpu_custom_call.1} parent=1 // pred_region
      %81 = dma.done [#allocation9], 4096
    $region37: #{tpu_custom_call.1} parent=1 // pred_fallthru
      _
    // Predicated region
    $region38: #{tpu_custom_call.1} parent=1 // pred_check
      _
    $region39: #{tpu_custom_call.1} parent=1 // pred_check_branch
      %83 = sbr.rel (0) target = $region41
    $region40: #{tpu_custom_call.1} parent=1 // pred_region
      %84 = dma.done [#allocation9], 256
    $region41: #{tpu_custom_call.1} parent=1 // pred_fallthru
      _
    %v86 = vld [vmem:[#allocation2] sm:$0xff]
    %v87 = vpack.c.bf16 %v86, %v86
    %v88 = vld [vmem:[#allocation10] ss:$8 sm:$0x3]
    %s89 = scalar_lea.vmem [#allocation10], 3
    %v90 = vld [vmem:[%s89] ss:$8 sm:$0x3]
    %s91 = scalar_lea.vmem [#allocation10], 6
    %v92 = vld [vmem:[%s91] ss:$8 sm:$0x3]
    %v93 = vld [vmem:[#allocation5] sm:$0xff]
    %v94 = vld [vmem:[#allocation5 + $0x8] sm:$0xff]
    %v95 = vld [vmem:[#allocation5 + $0x10] sm:$0xff]
    %v96 = vld [vmem:[#allocation5 + $0x18] sm:$0xff]
    %v98 = vlaneseq
    %v99 = vshrl.u32 %v98, 7
    %v100 = vsub.s32 0, %v99
    %v101 = vrot.slane %v88, %v100
    %v102 = vlaneseq
    %v103 = vshrl.u32 %v102, 7
    %v104 = vsub.s32 1, %v103
    %v105 = vrot.slane %v88, %v104
    %v112 = vunpack.c.l.b16 %v93
    %v113 = vunpack.c.h.b16 %v93
    %v114 = vunpack.c.l.b16 %v94
    %v115 = vunpack.c.h.b16 %v94
    %v116 = vunpack.c.l.b16 %v95
    %v117 = vunpack.c.h.b16 %v95
    %v118 = vunpack.c.l.b16 %v96
    %v119 = vunpack.c.h.b16 %v96
    %v120 = vpack.c.b16 %v114, %v112
    %v121 = vpack.c.b16 %v115, %v113
    %v122 = vpack.c.b16 %v118, %v116
    %v123 = vpack.c.b16 %v119, %v117
    %vm128 = vcmask 261120
    %v130 = vsel %vm128, %v87, 0
    %132 = vmatprep.subr.bf16.mxu0 %v121
    %133 = vmatpush1.bf16.msra.mxu0 %v120
    %134 = vmatprep.subr.bf16.mxu0 %v123
    %135 = vmatpush1.bf16.msra.mxu0 %v122
    %136 = vmatprep.subr.bf16.mxu0 0
    %137 = vmatpush1.bf16.msra.mxu0 0
    %138 = vmatprep.subr.bf16.mxu0 0
    %139 = vmatpush1.bf16.msra.mxu0 0
    %140 = vmatprep.subr.bf16.mxu0 0
    %141 = vmatpush1.bf16.msra.mxu0 0
    %142 = vmatprep.subr.bf16.mxu0 0
    %143 = vmatpush1.bf16.msra.mxu0 0
    %144 = vmatprep.subr.bf16.mxu0 0
    %145 = vmatpush1.bf16.msra.mxu0 0
    %146 = vmatprep.subr.bf16.mxu0 0
    %147 = vmatpush1.bf16.msra.mxu0 0
    %148 = vmatprep.subr.bf16.mxu0 0
    %149 = vmatpush1.bf16.msra.mxu0 0
    %150 = vmatprep.subr.bf16.mxu0 0
    %151 = vmatpush1.bf16.msra.mxu0 0
    %152 = vmatprep.subr.bf16.mxu0 0
    %153 = vmatpush1.bf16.msra.mxu0 0
    %154 = vmatprep.subr.bf16.mxu0 0
    %155 = vmatpush1.bf16.msra.mxu0 0
    %156 = vmatprep.subr.bf16.mxu0 0
    %157 = vmatpush1.bf16.msra.mxu0 0
    %158 = vmatprep.subr.bf16.mxu0 0
    %159 = vmatpush1.bf16.msra.mxu0 0
    %160 = vmatprep.subr.bf16.mxu0 0
    %161 = vmatpush1.bf16.msra.mxu0 0
    %162 = vmatprep.subr.bf16.mxu0 0
    %163 = vmatpush1.bf16.msra.mxu0 0
    %164 = vmatprep.mubr.bf16.mxu0 0
    %165 = vmatmul.mubr.bf16.gmra.mrb[0].mxu0 %v130
    %v166 = vpop.f32.mrb[0].mxu0
    %v167 = vadd.f32 %v101, %v166
    %v168 = vpop.f32.mrb[0].mxu0
    %v169 = vadd.f32 %v105, %v168
    %v170 = vpop.f32.mrb[0].mxu0
    %v171 = vpop.f32.mrb[0].mxu0
    %172 = vdwg.mxu0
    %v173 = vmax.f32 %v167, 0.0
    %v174 = vmax.f32 %v169, 0.0
    %s175 = scalar_lea.vmem [#allocation10], 1
    %v176 = vld [vmem:[%s175] ss:$8 sm:$0x3]
    %s177 = scalar_lea.vmem [#allocation10], 2
    %v178 = vld [vmem:[%s177] ss:$8 sm:$0x3]
    %v179 = vrot.slane %v173, 4
    %v180 = vadd.f32 %v173, %v179
    %v181 = vrot.slane %v180, 2
    %v182 = vadd.f32 %v180, %v181
    %v183 = vrot.slane %v182, 1
    %v184 = vadd.f32 %v182, %v183
    %v185 = vrot.slane %v174, 4
    %v186 = vadd.f32 %v174, %v185
    %v187 = vrot.slane %v186, 2
    %v188 = vadd.f32 %v186, %v187
    %v189 = vrot.slane %v188, 1
    %v190 = vadd.f32 %v188, %v189
    %v191 = vmul.f32 %v184, 0.125
    %v192 = vmul.f32 %v190, 0.125
    %v193 = vmul.f32 %v173, %v173
    %v194 = vmul.f32 %v174, %v174
    %v195 = vrot.slane %v193, 4
    %v196 = vadd.f32 %v193, %v195
    %v197 = vrot.slane %v196, 2
    %v198 = vadd.f32 %v196, %v197
    %v199 = vrot.slane %v198, 1
    %v200 = vadd.f32 %v198, %v199
    %v201 = vrot.slane %v194, 4
    %v202 = vadd.f32 %v194, %v201
    %v203 = vrot.slane %v202, 2
    %v204 = vadd.f32 %v202, %v203
    %v205 = vrot.slane %v204, 1
    %v206 = vadd.f32 %v204, %v205
    %v207 = vmul.f32 %v200, 0.125
    %v208 = vmul.f32 %v206, 0.125
    %v209 = vmul.f32 %v191, %v191
    %v210 = vmul.f32 %v192, %v192
    %v211 = vsub.f32 %v207, %v209
    %v212 = vsub.f32 %v208, %v210
    %v213 = vadd.f32 %v211, 1e-05
    %v214 = vadd.f32 %v212, 1e-05
    %v215 = vrsqrt.pop %v213
    %v216 = vrsqrt.pop %v214
    %v219 = vcombine.low %v215, %v216
    %v221 = vunpack.c.l.s4 1966171168
    %v222 = vunpack.c.0.s8 %v221
    %v223 = vlaneseq
    %v224 = vshrl.u32 %v223, 7
    %v225 = vsub.s32 %v222, %v224
    %v226 = vrot.slane %v219, %v225
    %v228 = vunpack.c.l.s4 1966171168
    %v229 = vunpack.c.0.s8 %v228
    %v230 = vlaneseq
    %v231 = vshrl.u32 %v230, 7
    %v232 = vsub.s32 %v229, %v231
    %v233 = vrot.slane %v226, %v232
    %v235 = vmul.f32 %v176, %v233
    %v237 = vlaneseq
    %v238 = vshrl.u32 %v237, 7
    %v239 = vsub.s32 0, %v238
    %v240 = vrot.slane %v235, %v239
    %v241 = vlaneseq
    %v242 = vshrl.u32 %v241, 7
    %v243 = vsub.s32 1, %v242
    %v244 = vrot.slane %v235, %v243
    %v247 = vmul.f32 %v191, %v240
    %v248 = vmul.f32 %v192, %v244
    %v251 = vcombine.low %v247, %v248
    %v253 = vunpack.c.l.s4 1966171168
    %v254 = vunpack.c.0.s8 %v253
    %v255 = vlaneseq
    %v256 = vshrl.u32 %v255, 7
    %v257 = vsub.s32 %v254, %v256
    %v258 = vrot.slane %v251, %v257
    %v260 = vunpack.c.l.s4 1966171168
    %v261 = vunpack.c.0.s8 %v260
    %v262 = vlaneseq
    %v263 = vshrl.u32 %v262, 7
    %v264 = vsub.s32 %v261, %v263
    %v265 = vrot.slane %v258, %v264
    %v267 = vsub.f32 %v178, %v265
    %v268 = vmul.f32 %v173, %v240
    %v269 = vmul.f32 %v174, %v244
    %v271 = vlaneseq
    %v272 = vshrl.u32 %v271, 7
    %v273 = vsub.s32 0, %v272
    %v274 = vrot.slane %v267, %v273
    %v275 = vlaneseq
    %v276 = vshrl.u32 %v275, 7
    %v277 = vsub.s32 1, %v276
    %v278 = vrot.slane %v267, %v277
    %v281 = vadd.f32 %v268, %v274
    %v282 = vadd.f32 %v269, %v278
    %v283 = vpack.c.bf16 %v281, %v281
    %v284 = vpack.c.bf16 %v282, %v282
    %v285 = vld [vmem:[#allocation7] sm:$0xff]
    %v286 = vld [vmem:[#allocation7 + $0x8] sm:$0xff]
    %v287 = vld [vmem:[#allocation7 + $0x10] sm:$0xff]
    %v288 = vld [vmem:[#allocation7 + $0x18] sm:$0xff]
    %v289 = vld [vmem:[#allocation7 + $0x20] sm:$0xff]
    %v290 = vld [vmem:[#allocation7 + $0x28] sm:$0xff]
    %v291 = vld [vmem:[#allocation7 + $0x30] sm:$0xff]
    %v292 = vld [vmem:[#allocation7 + $0x38] sm:$0xff]
    %v293 = vld [vmem:[#allocation7 + $0x40] sm:$0xff]
    %v294 = vld [vmem:[#allocation7 + $0x48] sm:$0xff]
    %v295 = vld [vmem:[#allocation7 + $0x50] sm:$0xff]
    %v296 = vld [vmem:[#allocation7 + $0x58] sm:$0xff]
    %v297 = vld [vmem:[#allocation7 + $0x60] sm:$0xff]
    %v298 = vld [vmem:[#allocation7 + $0x68] sm:$0xff]
    %v299 = vld [vmem:[#allocation7 + $0x70] sm:$0xff]
    %v300 = vld [vmem:[#allocation7 + $0x78] sm:$0xff]
    %v301 = vld [vmem:[#allocation7 + $0x80] sm:$0xff]
    %v302 = vld [vmem:[#allocation7 + $0x88] sm:$0xff]
    %v303 = vld [vmem:[#allocation7 + $0x90] sm:$0xff]
    %v304 = vld [vmem:[#allocation7 + $0x98] sm:$0xff]
    %v305 = vld [vmem:[#allocation7 + $0xa0] sm:$0xff]
    %v306 = vld [vmem:[#allocation7 + $0xa8] sm:$0xff]
    %v307 = vld [vmem:[#allocation7 + $0xb0] sm:$0xff]
    %v308 = vld [vmem:[#allocation7 + $0xb8] sm:$0xff]
    %v309 = vld [vmem:[#allocation7 + $0xc0] sm:$0xff]
    %v310 = vld [vmem:[#allocation7 + $0xc8] sm:$0xff]
    %v311 = vld [vmem:[#allocation7 + $0xd0] sm:$0xff]
    %v312 = vld [vmem:[#allocation7 + $0xd8] sm:$0xff]
    %v313 = vld [vmem:[#allocation7 + $0xe0] sm:$0xff]
    %v314 = vld [vmem:[#allocation7 + $0xe8] sm:$0xff]
    %v315 = vld [vmem:[#allocation7 + $0xf0] sm:$0xff]
    %v316 = vld [vmem:[#allocation7 + $0xf8] sm:$0xff]
    %v318 = vlaneseq
    %v319 = vshrl.u32 %v318, 7
    %v320 = vsub.s32 0, %v319
    %v321 = vrot.slane %v90, %v320
    %v322 = vlaneseq
    %v323 = vshrl.u32 %v322, 7
    %v324 = vsub.s32 1, %v323
    %v325 = vrot.slane %v90, %v324
    %v360 = vunpack.c.l.b16 %v285
    %v361 = vunpack.c.h.b16 %v285
    %v362 = vunpack.c.l.b16 %v286
    %v363 = vunpack.c.h.b16 %v286
    %v364 = vunpack.c.l.b16 %v287
    %v365 = vunpack.c.h.b16 %v287
    %v366 = vunpack.c.l.b16 %v288
    %v367 = vunpack.c.h.b16 %v288
    %v368 = vunpack.c.l.b16 %v289
    %v369 = vunpack.c.h.b16 %v289
    %v370 = vunpack.c.l.b16 %v290
    %v371 = vunpack.c.h.b16 %v290
    %v372 = vunpack.c.l.b16 %v291
    %v373 = vunpack.c.h.b16 %v291
    %v374 = vunpack.c.l.b16 %v292
    %v375 = vunpack.c.h.b16 %v292
    %v376 = vunpack.c.l.b16 %v293
    %v377 = vunpack.c.h.b16 %v293
    %v378 = vunpack.c.l.b16 %v294
    %v379 = vunpack.c.h.b16 %v294
    %v380 = vunpack.c.l.b16 %v295
    %v381 = vunpack.c.h.b16 %v295
    %v382 = vunpack.c.l.b16 %v296
    %v383 = vunpack.c.h.b16 %v296
    %v384 = vunpack.c.l.b16 %v297
    %v385 = vunpack.c.h.b16 %v297
    %v386 = vunpack.c.l.b16 %v298
    %v387 = vunpack.c.h.b16 %v298
    %v388 = vunpack.c.l.b16 %v299
    %v389 = vunpack.c.h.b16 %v299
    %v390 = vunpack.c.l.b16 %v300
    %v391 = vunpack.c.h.b16 %v300
    %v392 = vunpack.c.l.b16 %v301
    %v393 = vunpack.c.h.b16 %v301
    %v394 = vunpack.c.l.b16 %v302
    %v395 = vunpack.c.h.b16 %v302
    %v396 = vunpack.c.l.b16 %v303
    %v397 = vunpack.c.h.b16 %v303
    %v398 = vunpack.c.l.b16 %v304
    %v399 = vunpack.c.h.b16 %v304
    %v400 = vunpack.c.l.b16 %v305
    %v401 = vunpack.c.h.b16 %v305
    %v402 = vunpack.c.l.b16 %v306
    %v403 = vunpack.c.h.b16 %v306
    %v404 = vunpack.c.l.b16 %v307
    %v405 = vunpack.c.h.b16 %v307
    %v406 = vunpack.c.l.b16 %v308
    %v407 = vunpack.c.h.b16 %v308
    %v408 = vunpack.c.l.b16 %v309
    %v409 = vunpack.c.h.b16 %v309
    %v410 = vunpack.c.l.b16 %v310
    %v411 = vunpack.c.h.b16 %v310
    %v412 = vunpack.c.l.b16 %v311
    %v413 = vunpack.c.h.b16 %v311
    %v414 = vunpack.c.l.b16 %v312
    %v415 = vunpack.c.h.b16 %v312
    %v416 = vunpack.c.l.b16 %v313
    %v417 = vunpack.c.h.b16 %v313
    %v418 = vunpack.c.l.b16 %v314
    %v419 = vunpack.c.h.b16 %v314
    %v420 = vunpack.c.l.b16 %v315
    %v421 = vunpack.c.h.b16 %v315
    %v422 = vunpack.c.l.b16 %v316
    %v423 = vunpack.c.h.b16 %v316
    %v424 = vpack.c.b16 %v362, %v360
    %v425 = vpack.c.b16 %v363, %v361
    %v426 = vpack.c.b16 %v366, %v364
    %v427 = vpack.c.b16 %v367, %v365
    %v428 = vpack.c.b16 %v370, %v368
    %v429 = vpack.c.b16 %v371, %v369
    %v430 = vpack.c.b16 %v374, %v372
    %v431 = vpack.c.b16 %v375, %v373
    %v432 = vpack.c.b16 %v378, %v376
    %v433 = vpack.c.b16 %v379, %v377
    %v434 = vpack.c.b16 %v382, %v380
    %v435 = vpack.c.b16 %v383, %v381
    %v436 = vpack.c.b16 %v386, %v384
    %v437 = vpack.c.b16 %v387, %v385
    %v438 = vpack.c.b16 %v390, %v388
    %v439 = vpack.c.b16 %v391, %v389
    %v440 = vpack.c.b16 %v394, %v392
    %v441 = vpack.c.b16 %v395, %v393
    %v442 = vpack.c.b16 %v398, %v396
    %v443 = vpack.c.b16 %v399, %v397
    %v444 = vpack.c.b16 %v402, %v400
    %v445 = vpack.c.b16 %v403, %v401
    %v446 = vpack.c.b16 %v406, %v404
    %v447 = vpack.c.b16 %v407, %v405
    %v448 = vpack.c.b16 %v410, %v408
    %v449 = vpack.c.b16 %v411, %v409
    %v450 = vpack.c.b16 %v414, %v412
    %v451 = vpack.c.b16 %v415, %v413
    %v452 = vpack.c.b16 %v418, %v416
    %v453 = vpack.c.b16 %v419, %v417
    %v454 = vpack.c.b16 %v422, %v420
    %v455 = vpack.c.b16 %v423, %v421
    %488 = vmatprep.subr.bf16.mxu0 %v425
    %489 = vmatpush1.bf16.msra.mxu0 %v424
    %490 = vmatprep.subr.bf16.mxu0 %v427
    %491 = vmatpush1.bf16.msra.mxu0 %v426
    %492 = vmatprep.subr.bf16.mxu0 %v429
    %493 = vmatpush1.bf16.msra.mxu0 %v428
    %494 = vmatprep.subr.bf16.mxu0 %v431
    %495 = vmatpush1.bf16.msra.mxu0 %v430
    %496 = vmatprep.subr.bf16.mxu0 %v433
    %497 = vmatpush1.bf16.msra.mxu0 %v432
    %498 = vmatprep.subr.bf16.mxu0 %v435
    %499 = vmatpush1.bf16.msra.mxu0 %v434
    %500 = vmatprep.subr.bf16.mxu0 %v437
    %501 = vmatpush1.bf16.msra.mxu0 %v436
    %502 = vmatprep.subr.bf16.mxu0 %v439
    %503 = vmatpush1.bf16.msra.mxu0 %v438
    %504 = vmatprep.subr.bf16.mxu0 %v441
    %505 = vmatpush1.bf16.msra.mxu0 %v440
    %506 = vmatprep.subr.bf16.mxu0 %v443
    %507 = vmatpush1.bf16.msra.mxu0 %v442
    %508 = vmatprep.subr.bf16.mxu0 %v445
    %509 = vmatpush1.bf16.msra.mxu0 %v444
    %510 = vmatprep.subr.bf16.mxu0 %v447
    %511 = vmatpush1.bf16.msra.mxu0 %v446
    %512 = vmatprep.subr.bf16.mxu0 %v449
    %513 = vmatpush1.bf16.msra.mxu0 %v448
    %514 = vmatprep.subr.bf16.mxu0 %v451
    %515 = vmatpush1.bf16.msra.mxu0 %v450
    %516 = vmatprep.subr.bf16.mxu0 %v453
    %517 = vmatpush1.bf16.msra.mxu0 %v452
    %518 = vmatprep.subr.bf16.mxu0 %v455
    %519 = vmatpush1.bf16.msra.mxu0 %v454
    %520 = vmatprep.mubr.bf16.mxu0 %v284
    %521 = vmatmul.mubr.bf16.gmra.mrb[0].mxu0 %v283
    %v522 = vpop.f32.mrb[0].mxu0
    %v523 = vadd.f32 %v321, %v522
    %v524 = vpop.f32.mrb[0].mxu0
    %v525 = vadd.f32 %v325, %v524
    %v526 = vpop.f32.mrb[0].mxu0
    %v527 = vpop.f32.mrb[0].mxu0
    %528 = vdwg.mxu0
    %v529 = vmax.f32 %v523, 0.0
    %v530 = vmax.f32 %v525, 0.0
    %s531 = scalar_lea.vmem [#allocation10], 4
    %v532 = vld [vmem:[%s531] ss:$8 sm:$0x3]
    %s533 = scalar_lea.vmem [#allocation10], 5
    %v534 = vld [vmem:[%s533] ss:$8 sm:$0x3]
    %v535 = vrot.slane %v529, 4
    %v536 = vadd.f32 %v529, %v535
    %v537 = vrot.slane %v536, 2
    %v538 = vadd.f32 %v536, %v537
    %v539 = vrot.slane %v538, 1
    %v540 = vadd.f32 %v538, %v539
    %v541 = vrot.slane %v530, 4
    %v542 = vadd.f32 %v530, %v541
    %v543 = vrot.slane %v542, 2
    %v544 = vadd.f32 %v542, %v543
    %v545 = vrot.slane %v544, 1
    %v546 = vadd.f32 %v544, %v545
    %v547 = vmul.f32 %v540, 0.125
    %v548 = vmul.f32 %v546, 0.125
    %v549 = vmul.f32 %v529, %v529
    %v550 = vmul.f32 %v530, %v530
    %v551 = vrot.slane %v549, 4
    %v552 = vadd.f32 %v549, %v551
    %v553 = vrot.slane %v552, 2
    %v554 = vadd.f32 %v552, %v553
    %v555 = vrot.slane %v554, 1
    %v556 = vadd.f32 %v554, %v555
    %v557 = vrot.slane %v550, 4
    %v558 = vadd.f32 %v550, %v557
    %v559 = vrot.slane %v558, 2
    %v560 = vadd.f32 %v558, %v559
    %v561 = vrot.slane %v560, 1
    %v562 = vadd.f32 %v560, %v561
    %v563 = vmul.f32 %v556, 0.125
    %v564 = vmul.f32 %v562, 0.125
    %v565 = vmul.f32 %v547, %v547
    %v566 = vmul.f32 %v548, %v548
    %v567 = vsub.f32 %v563, %v565
    %v568 = vsub.f32 %v564, %v566
    %v569 = vadd.f32 %v567, 1e-05
    %v570 = vadd.f32 %v568, 1e-05
    %v571 = vrsqrt.pop %v569
    %v572 = vrsqrt.pop %v570
    %v575 = vcombine.low %v571, %v572
    %v577 = vunpack.c.l.s4 1966171168
    %v578 = vunpack.c.0.s8 %v577
    %v579 = vlaneseq
    %v580 = vshrl.u32 %v579, 7
    %v581 = vsub.s32 %v578, %v580
    %v582 = vrot.slane %v575, %v581
    %v584 = vunpack.c.l.s4 1966171168
    %v585 = vunpack.c.0.s8 %v584
    %v586 = vlaneseq
    %v587 = vshrl.u32 %v586, 7
    %v588 = vsub.s32 %v585, %v587
    %v589 = vrot.slane %v582, %v588
    %v591 = vmul.f32 %v532, %v589
    %v593 = vlaneseq
    %v594 = vshrl.u32 %v593, 7
    %v595 = vsub.s32 0, %v594
    %v596 = vrot.slane %v591, %v595
    %v597 = vlaneseq
    %v598 = vshrl.u32 %v597, 7
    %v599 = vsub.s32 1, %v598
    %v600 = vrot.slane %v591, %v599
    %v603 = vmul.f32 %v547, %v596
    %v604 = vmul.f32 %v548, %v600
    %v607 = vcombine.low %v603, %v604
    %v609 = vunpack.c.l.s4 1966171168
    %v610 = vunpack.c.0.s8 %v609
    %v611 = vlaneseq
    %v612 = vshrl.u32 %v611, 7
    %v613 = vsub.s32 %v610, %v612
    %v614 = vrot.slane %v607, %v613
    %v616 = vunpack.c.l.s4 1966171168
    %v617 = vunpack.c.0.s8 %v616
    %v618 = vlaneseq
    %v619 = vshrl.u32 %v618, 7
    %v620 = vsub.s32 %v617, %v619
    %v621 = vrot.slane %v614, %v620
    %v623 = vsub.f32 %v534, %v621
    %v624 = vmul.f32 %v529, %v596
    %v625 = vmul.f32 %v530, %v600
    %v627 = vlaneseq
    %v628 = vshrl.u32 %v627, 7
    %v629 = vsub.s32 0, %v628
    %v630 = vrot.slane %v623, %v629
    %v631 = vlaneseq
    %v632 = vshrl.u32 %v631, 7
    %v633 = vsub.s32 1, %v632
    %v634 = vrot.slane %v623, %v633
    %v637 = vadd.f32 %v624, %v630
    %v638 = vadd.f32 %v625, %v634
    %v639 = vpack.c.bf16 %v637, %v637
    %v640 = vpack.c.bf16 %v638, %v638
    %v641 = vld [vmem:[#allocation8] sm:$0xff]
    %v642 = vld [vmem:[#allocation8 + $0x8] sm:$0xff]
    %v643 = vld [vmem:[#allocation8 + $0x10] sm:$0xff]
    %v644 = vld [vmem:[#allocation8 + $0x18] sm:$0xff]
    %v645 = vld [vmem:[#allocation8 + $0x20] sm:$0xff]
    %v646 = vld [vmem:[#allocation8 + $0x28] sm:$0xff]
    %v647 = vld [vmem:[#allocation8 + $0x30] sm:$0xff]
    %v648 = vld [vmem:[#allocation8 + $0x38] sm:$0xff]
    %v649 = vld [vmem:[#allocation8 + $0x40] sm:$0xff]
    %v650 = vld [vmem:[#allocation8 + $0x48] sm:$0xff]
    %v651 = vld [vmem:[#allocation8 + $0x50] sm:$0xff]
    %v652 = vld [vmem:[#allocation8 + $0x58] sm:$0xff]
    %v653 = vld [vmem:[#allocation8 + $0x60] sm:$0xff]
    %v654 = vld [vmem:[#allocation8 + $0x68] sm:$0xff]
    %v655 = vld [vmem:[#allocation8 + $0x70] sm:$0xff]
    %v656 = vld [vmem:[#allocation8 + $0x78] sm:$0xff]
    %v657 = vld [vmem:[#allocation8 + $0x80] sm:$0xff]
    %v658 = vld [vmem:[#allocation8 + $0x88] sm:$0xff]
    %v659 = vld [vmem:[#allocation8 + $0x90] sm:$0xff]
    %v660 = vld [vmem:[#allocation8 + $0x98] sm:$0xff]
    %v661 = vld [vmem:[#allocation8 + $0xa0] sm:$0xff]
    %v662 = vld [vmem:[#allocation8 + $0xa8] sm:$0xff]
    %v663 = vld [vmem:[#allocation8 + $0xb0] sm:$0xff]
    %v664 = vld [vmem:[#allocation8 + $0xb8] sm:$0xff]
    %v665 = vld [vmem:[#allocation8 + $0xc0] sm:$0xff]
    %v666 = vld [vmem:[#allocation8 + $0xc8] sm:$0xff]
    %v667 = vld [vmem:[#allocation8 + $0xd0] sm:$0xff]
    %v668 = vld [vmem:[#allocation8 + $0xd8] sm:$0xff]
    %v669 = vld [vmem:[#allocation8 + $0xe0] sm:$0xff]
    %v670 = vld [vmem:[#allocation8 + $0xe8] sm:$0xff]
    %v671 = vld [vmem:[#allocation8 + $0xf0] sm:$0xff]
    %v672 = vld [vmem:[#allocation8 + $0xf8] sm:$0xff]
    %v674 = vlaneseq
    %v675 = vshrl.u32 %v674, 7
    %v676 = vsub.s32 0, %v675
    %v677 = vrot.slane %v92, %v676
    %v678 = vlaneseq
    %v679 = vshrl.u32 %v678, 7
    %v680 = vsub.s32 1, %v679
    %v681 = vrot.slane %v92, %v680
    %v716 = vunpack.c.l.b16 %v641
    %v717 = vunpack.c.h.b16 %v641
    %v718 = vunpack.c.l.b16 %v642
    %v719 = vunpack.c.h.b16 %v642
    %v720 = vunpack.c.l.b16 %v643
    %v721 = vunpack.c.h.b16 %v643
    %v722 = vunpack.c.l.b16 %v644
    %v723 = vunpack.c.h.b16 %v644
    %v724 = vunpack.c.l.b16 %v645
    %v725 = vunpack.c.h.b16 %v645
    %v726 = vunpack.c.l.b16 %v646
    %v727 = vunpack.c.h.b16 %v646
    %v728 = vunpack.c.l.b16 %v647
    %v729 = vunpack.c.h.b16 %v647
    %v730 = vunpack.c.l.b16 %v648
    %v731 = vunpack.c.h.b16 %v648
    %v732 = vunpack.c.l.b16 %v649
    %v733 = vunpack.c.h.b16 %v649
    %v734 = vunpack.c.l.b16 %v650
    %v735 = vunpack.c.h.b16 %v650
    %v736 = vunpack.c.l.b16 %v651
    %v737 = vunpack.c.h.b16 %v651
    %v738 = vunpack.c.l.b16 %v652
    %v739 = vunpack.c.h.b16 %v652
    %v740 = vunpack.c.l.b16 %v653
    %v741 = vunpack.c.h.b16 %v653
    %v742 = vunpack.c.l.b16 %v654
    %v743 = vunpack.c.h.b16 %v654
    %v744 = vunpack.c.l.b16 %v655
    %v745 = vunpack.c.h.b16 %v655
    %v746 = vunpack.c.l.b16 %v656
    %v747 = vunpack.c.h.b16 %v656
    %v748 = vunpack.c.l.b16 %v657
    %v749 = vunpack.c.h.b16 %v657
    %v750 = vunpack.c.l.b16 %v658
    %v751 = vunpack.c.h.b16 %v658
    %v752 = vunpack.c.l.b16 %v659
    %v753 = vunpack.c.h.b16 %v659
    %v754 = vunpack.c.l.b16 %v660
    %v755 = vunpack.c.h.b16 %v660
    %v756 = vunpack.c.l.b16 %v661
    %v757 = vunpack.c.h.b16 %v661
    %v758 = vunpack.c.l.b16 %v662
    %v759 = vunpack.c.h.b16 %v662
    %v760 = vunpack.c.l.b16 %v663
    %v761 = vunpack.c.h.b16 %v663
    %v762 = vunpack.c.l.b16 %v664
    %v763 = vunpack.c.h.b16 %v664
    %v764 = vunpack.c.l.b16 %v665
    %v765 = vunpack.c.h.b16 %v665
    %v766 = vunpack.c.l.b16 %v666
    %v767 = vunpack.c.h.b16 %v666
    %v768 = vunpack.c.l.b16 %v667
    %v769 = vunpack.c.h.b16 %v667
    %v770 = vunpack.c.l.b16 %v668
    %v771 = vunpack.c.h.b16 %v668
    %v772 = vunpack.c.l.b16 %v669
    %v773 = vunpack.c.h.b16 %v669
    %v774 = vunpack.c.l.b16 %v670
    %v775 = vunpack.c.h.b16 %v670
    %v776 = vunpack.c.l.b16 %v671
    %v777 = vunpack.c.h.b16 %v671
    %v778 = vunpack.c.l.b16 %v672
    %v779 = vunpack.c.h.b16 %v672
    %v780 = vpack.c.b16 %v718, %v716
    %v781 = vpack.c.b16 %v719, %v717
    %v782 = vpack.c.b16 %v722, %v720
    %v783 = vpack.c.b16 %v723, %v721
    %v784 = vpack.c.b16 %v726, %v724
    %v785 = vpack.c.b16 %v727, %v725
    %v786 = vpack.c.b16 %v730, %v728
    %v787 = vpack.c.b16 %v731, %v729
    %v788 = vpack.c.b16 %v734, %v732
    %v789 = vpack.c.b16 %v735, %v733
    %v790 = vpack.c.b16 %v738, %v736
    %v791 = vpack.c.b16 %v739, %v737
    %v792 = vpack.c.b16 %v742, %v740
    %v793 = vpack.c.b16 %v743, %v741
    %v794 = vpack.c.b16 %v746, %v744
    %v795 = vpack.c.b16 %v747, %v745
    %v796 = vpack.c.b16 %v750, %v748
    %v797 = vpack.c.b16 %v751, %v749
    %v798 = vpack.c.b16 %v754, %v752
    %v799 = vpack.c.b16 %v755, %v753
    %v800 = vpack.c.b16 %v758, %v756
    %v801 = vpack.c.b16 %v759, %v757
    %v802 = vpack.c.b16 %v762, %v760
    %v803 = vpack.c.b16 %v763, %v761
    %v804 = vpack.c.b16 %v766, %v764
    %v805 = vpack.c.b16 %v767, %v765
    %v806 = vpack.c.b16 %v770, %v768
    %v807 = vpack.c.b16 %v771, %v769
    %v808 = vpack.c.b16 %v774, %v772
    %v809 = vpack.c.b16 %v775, %v773
    %v810 = vpack.c.b16 %v778, %v776
    %v811 = vpack.c.b16 %v779, %v777
    %844 = vmatprep.subr.bf16.mxu0 %v781
    %845 = vmatpush1.bf16.msra.mxu0 %v780
    %846 = vmatprep.subr.bf16.mxu0 %v783
    %847 = vmatpush1.bf16.msra.mxu0 %v782
    %848 = vmatprep.subr.bf16.mxu0 %v785
    %849 = vmatpush1.bf16.msra.mxu0 %v784
    %850 = vmatprep.subr.bf16.mxu0 %v787
    %851 = vmatpush1.bf16.msra.mxu0 %v786
    %852 = vmatprep.subr.bf16.mxu0 %v789
    %853 = vmatpush1.bf16.msra.mxu0 %v788
    %854 = vmatprep.subr.bf16.mxu0 %v791
    %855 = vmatpush1.bf16.msra.mxu0 %v790
    %856 = vmatprep.subr.bf16.mxu0 %v793
    %857 = vmatpush1.bf16.msra.mxu0 %v792
    %858 = vmatprep.subr.bf16.mxu0 %v795
    %859 = vmatpush1.bf16.msra.mxu0 %v794
    %860 = vmatprep.subr.bf16.mxu0 %v797
    %861 = vmatpush1.bf16.msra.mxu0 %v796
    %862 = vmatprep.subr.bf16.mxu0 %v799
    %863 = vmatpush1.bf16.msra.mxu0 %v798
    %864 = vmatprep.subr.bf16.mxu0 %v801
    %865 = vmatpush1.bf16.msra.mxu0 %v800
    %866 = vmatprep.subr.bf16.mxu0 %v803
    %867 = vmatpush1.bf16.msra.mxu0 %v802
    %868 = vmatprep.subr.bf16.mxu0 %v805
    %869 = vmatpush1.bf16.msra.mxu0 %v804
    %870 = vmatprep.subr.bf16.mxu0 %v807
    %871 = vmatpush1.bf16.msra.mxu0 %v806
    %872 = vmatprep.subr.bf16.mxu0 %v809
    %873 = vmatpush1.bf16.msra.mxu0 %v808
    %874 = vmatprep.subr.bf16.mxu0 %v811
    %875 = vmatpush1.bf16.msra.mxu0 %v810
    %876 = vmatprep.mubr.bf16.mxu0 %v640
    %877 = vmatmul.mubr.bf16.gmra.mrb[0].mxu0 %v639
    %v878 = vpop.f32.mrb[0].mxu0
    %v879 = vadd.f32 %v677, %v878
    %v880 = vpop.f32.mrb[0].mxu0
    %v881 = vadd.f32 %v681, %v880
    %v882 = vpop.f32.mrb[0].mxu0
    %v883 = vpop.f32.mrb[0].mxu0
    %884 = vdwg.mxu0
    %v885 = vtanh.pop %v879
    %v886 = vtanh.pop %v881
    %887 = vst [vmem:[#allocation11] sm:$0xff] %v885
    %888 = vst [vmem:[#allocation11 + $0x8] sm:$0xff] %v886
    // Predicated region
    $region42: #{tpu_custom_call.1} parent=1 // pred_check
      _
    $region43: #{tpu_custom_call.1} parent=1 // pred_check_branch
      %890 = sbr.rel (0) target = $region45
    $region44: #{tpu_custom_call.1} parent=1 // pred_region
      %s892 = ssub.s32 256, 256
      %893 = vsyncadd [#allocation4], %s892
      %s895 = sshll.u32 [#allocation11], 4
      %s896 = int_to_ptr.vmem [resolvable:$true] %s895
      %898 = dma.vmem_to_hbm [thread:$0]  %s896, 256, %s5, [#allocation4]
    $region45: #{tpu_custom_call.1} parent=1 // pred_fallthru
      _
    // Predicated region
    $region46: #{tpu_custom_call.1} parent=1 // pred_check
      _
    $region47: #{tpu_custom_call.1} parent=1 // pred_check_branch
      %900 = sbr.rel (0) target = $region49
    $region48: #{tpu_custom_call.1} parent=1 // pred_region
      %901 = dma.done [#allocation4], 256
    $region49: #{tpu_custom_call.1} parent=1 // pred_fallthru
      _
    %902 = vsyncpa [#allocation3], 1
    %903 = vsyncpa [#allocation6], 1
    %904 = vsyncpa [#allocation9], 1
    %905 = vsyncpa [#allocation4], 1

</llo_original>
